<compile_context>
chip_gen: v7x
topology: tpu7x:2x2x1
jax: 0.10.0
libtpu: 0.0.40
codegen_flags: <defaults>
</compile_context>

<pallas_src>
import functools

import jax
import jax.numpy as jnp
from jax.experimental import pallas as pl
from jax.experimental.pallas import tpu as pltpu

S_PAD = 128   # lane-dense decoder / logits width (decoders zero-padded to this)
H_PAD = 128   # lane-dense hidden width (controller_hid zero-padded to this)


def _round_up(x, m):
    return (x + m - 1) // m * m


def _controller_rollout_kernel(bidx_ref,                       # scalar prefetch (SMEM), (T,)
                               x_ref, h0_ref, c0_ref,          # (T,BP,HP), (BP,HP), (BP,HP)
                               w_ref, b_ref, dw_ref, db_ref,   # fused LSTM weights + ALL decoders
                               logits_ref, h_out_ref, c_out_ref,
                               *, tanh_c, train, n_steps, hid_pad):
    hp = hid_pad

    def step(t, carry):
        h, c = carry
        x = x_ref[t]                                        # (BP, HP)

        # Single fused MXU matmul: (BP, 2*HP) @ (2*HP, 4*HP).  Gate columns are padded to
        # 128-lane boundaries so the slices below are whole-vreg selections.
        xh = jnp.concatenate([x, h], axis=-1)
        pre = jnp.dot(xh, w_ref[...], preferred_element_type=jnp.float32) + b_ref[...]

        # PyTorch LSTMCell gate order: input, forget, cell(g), output.
        i_g = jax.nn.sigmoid(pre[:, 0 * hp:1 * hp])
        f_g = jax.nn.sigmoid(pre[:, 1 * hp:2 * hp])
        g_g = jnp.tanh(pre[:, 2 * hp:3 * hp])
        o_g = jax.nn.sigmoid(pre[:, 3 * hp:4 * hp])

        c_new = f_g * c + i_g * g_g
        h_new = o_g * jnp.tanh(c_new)

        # Decoder for this step's block: dynamic leading-axis index into the resident
        # decoder slab; 1/temperature already folded into dw/db at param-prep time.
        blk = bidx_ref[t]
        logits = (jnp.dot(h_new, dw_ref[blk], preferred_element_type=jnp.float32)
                  + db_ref[blk])
        if train:  # mode == 'train'
            logits = tanh_c * jnp.tanh(logits)

        logits_ref[t] = logits.astype(logits_ref.dtype)     # lane-dense (BP, S_PAD) store
        return (h_new, c_new)

    h_fin, c_fin = jax.lax.fori_loop(
        0, n_steps, step, (h0_ref[...], c0_ref[...]), unroll=True)

    h_out_ref[...] = h_fin.astype(h_out_ref.dtype)
    c_out_ref[...] = c_fin.astype(c_out_ref.dtype)


def controller_forward_steps(x_seq, hidden, kparams, block_indices, *,
                             tanh_c=2.5, mode='train'):
    """Runs T chained MultiController.forward steps in ONE pallas_call / ONE grid step.

    x_seq:         (T, B, H) embedded inputs per step.
    hidden:        (h0, c0), each (B, H).
    kparams:       prepare_kernel_params(...) output (padded layout, temp folded in).
    block_indices: (T,) int decoder index per step (runtime data, no recompile).
    Returns (logits_padded (T, B, S_PAD), (h_T, c_T)).
    """
    h0, c0 = hidden
    T, B, H = x_seq.shape
    HP = kparams['hid_pad']
    assert H == kparams['hid']
    BP = _round_up(max(B, 8), 8)
    n_blocks, _, s_pad = kparams['dec_w'].shape

    # Pad batch to 8 sublanes and hidden to 128 lanes (zeros stay zero through the
    # recurrence because all padded weight rows/cols and biases are zero).
    xp = jnp.zeros((T, BP, HP), jnp.float32).at[:, :B, :H].set(x_seq.astype(jnp.float32))
    hp0 = jnp.zeros((BP, HP), jnp.float32).at[:B, :H].set(h0.astype(jnp.float32))
    cp0 = jnp.zeros((BP, HP), jnp.float32).at[:B, :H].set(c0.astype(jnp.float32))
    bidx = jnp.asarray(block_indices, dtype=jnp.int32)
    assert bidx.shape == (T,)

    kern = functools.partial(
        _controller_rollout_kernel,
        tanh_c=float(tanh_c),
        train=(mode == 'train'),
        n_steps=T,
        hid_pad=HP,
    )

    grid_spec = pltpu.PrefetchScalarGridSpec(
        num_scalar_prefetch=1,
        grid=(1,),                                           # everything resident; loop in-kernel
        in_specs=[
            pl.BlockSpec((T, BP, HP), lambda i, bi: (0, 0, 0)),         # x_seq
            pl.BlockSpec((BP, HP), lambda i, bi: (0, 0)),               # h0
            pl.BlockSpec((BP, HP), lambda i, bi: (0, 0)),               # c0
            pl.BlockSpec((2 * HP, 4 * HP), lambda i, bi: (0, 0)),       # fused LSTM weight
            pl.BlockSpec((1, 4 * HP), lambda i, bi: (0, 0)),            # fused LSTM bias
            pl.BlockSpec((n_blocks, HP, s_pad), lambda i, bi: (0, 0, 0)),  # ALL decoder weights
            pl.BlockSpec((n_blocks, 1, s_pad), lambda i, bi: (0, 0, 0)),   # ALL decoder biases
        ],
        out_specs=(
            pl.BlockSpec((T, BP, s_pad), lambda i, bi: (0, 0, 0)),      # per-step logits
            pl.BlockSpec((BP, HP), lambda i, bi: (0, 0)),               # final h
            pl.BlockSpec((BP, HP), lambda i, bi: (0, 0)),               # final c
        ),
    )

    logits_pad, h_new, c_new = pl.pallas_call(
        kern,
        grid_spec=grid_spec,
        out_shape=(jax.ShapeDtypeStruct((T, BP, s_pad), jnp.float32),
                   jax.ShapeDtypeStruct((BP, HP), jnp.float32),
                   jax.ShapeDtypeStruct((BP, HP), jnp.float32)),
        compiler_params=pltpu.CompilerParams(
            dimension_semantics=("arbitrary",)),             # serial recurrence: single core
    )(bidx, xp, hp0, cp0, kparams['w'], kparams['b'], kparams['dec_w'], kparams['dec_b'])

    return logits_pad[:, :B, :], (h_new[:B, :H], c_new[:B, :H])


def controller_forward(inputs, hidden, kparams, block_idx, *, tanh_c=2.5, mode='train'):
    """Equivalent of MultiController.forward(inputs, hidden, block_idx) (single step).

    softmax_temperature is already folded into kparams (prepare_kernel_params).
    """
    logits_pad, (h_new, c_new) = controller_forward_steps(
        inputs[None], hidden, kparams, jnp.asarray([block_idx], jnp.int32),
        tanh_c=tanh_c, mode=mode)
    S = kparams['decoder_sizes'][block_idx]
    return logits_pad[0, :, :S], (h_new, c_new)


def _ref_forward(inputs, hidden, params, block_idx, *,
                 softmax_temperature=5.0, tanh_c=2.5, mode='train'):
    """Pure-JAX reference matching torch.nn.LSTMCell + Linear semantics (logical params)."""
    h, c = hidden
    H = h.shape[1]
    w, b = params['w'], params['b']
    hi = jax.lax.Precision.HIGHEST
    pre = (jnp.dot(inputs, w[:H], precision=hi)
           + jnp.dot(h, w[H:], precision=hi) + b)
    i_g = jax.nn.sigmoid(pre[:, 0:H])
    f_g = jax.nn.sigmoid(pre[:, H:2 * H])
    g_g = jnp.tanh(pre[:, 2 * H:3 * H])
    o_g = jax.nn.sigmoid(pre[:, 3 * H:4 * H])
    c_new = f_g * c + i_g * g_g
    h_new = o_g * jnp.tanh(c_new)
    S = params['decoder_sizes'][block_idx]
    logits = (jnp.dot(h_new, params['dec_w'][block_idx, :, :S], precision=hi)
              + params['dec_b'][block_idx, 0, :S]) / softmax_temperature
    if mode == 'train':
        logits = tanh_c * jnp.tanh(logits)
    return logits, (h_new, c_new)


def init_params(key, controller_hid, decoder_sizes, init_range=0.1, s_pad=S_PAD):
    """Mimics MultiController.reset_parameters: uniform(-0.1, 0.1), decoder bias = 0.

    Logical fused layout:
      w     : [2H, 4H]  (rows 0:H act on x, rows H:2H act on h; columns = gates i,f,g,o)
      b     : [1, 4H]   (b_ih + b_hh combined; sum of two uniforms, matching torch's effect)
      dec_w : [n_blocks, H, s_pad]  zero-padded decoder weights
      dec_b : [n_blocks, 1, s_pad]  zero bias (matches bias.data.fill_(0))
    """
    H = controller_hid
    k_w, k_b1, k_b2, k_dec = jax.random.split(key, 4)
    w = jax.random.uniform(k_w, (2 * H, 4 * H), jnp.float32, -init_range, init_range)
    b = (jax.random.uniform(k_b1, (1, 4 * H), jnp.float32, -init_range, init_range)
         + jax.random.uniform(k_b2, (1, 4 * H), jnp.float32, -init_range, init_range))
    n_dec = len(decoder_sizes)
    dec_w = jnp.zeros((n_dec, H, s_pad), jnp.float32)
    dec_b = jnp.zeros((n_dec, 1, s_pad), jnp.float32)
    for i, size in enumerate(decoder_sizes):
        kw = jax.random.fold_in(k_dec, i)
        wi = jax.random.uniform(kw, (H, size), jnp.float32, -init_range, init_range)
        dec_w = dec_w.at[i, :, :size].set(wi)
    return {'w': w, 'b': b, 'dec_w': dec_w, 'dec_b': dec_b,
            'decoder_sizes': list(decoder_sizes)}


def prepare_kernel_params(params, *, softmax_temperature=5.0):
    """Repack logical params into the padded kernel layout.

    - hidden padded to H_PAD=128 lanes; each gate's columns padded to a 128-lane boundary
      so in-kernel gate slices are vreg-aligned.
    - 1/softmax_temperature folded into the decoder weights/bias.
    """
    w, b = params['w'], params['b']
    dec_w, dec_b = params['dec_w'], params['dec_b']
    H = w.shape[0] // 2
    HP = max(H_PAD, _round_up(H, 128))

    w_pad = jnp.zeros((2 * HP, 4 * HP), jnp.float32)
    b_pad = jnp.zeros((1, 4 * HP), jnp.float32)
    for g in range(4):
        w_pad = w_pad.at[0:H, g * HP:g * HP + H].set(w[0:H, g * H:(g + 1) * H])
        w_pad = w_pad.at[HP:HP + H, g * HP:g * HP + H].set(w[H:2 * H, g * H:(g + 1) * H])
        b_pad = b_pad.at[0, g * HP:g * HP + H].set(b[0, g * H:(g + 1) * H])

    inv_t = 1.0 / float(softmax_temperature)
    n_blocks, _, s_pad = dec_w.shape
    dw_pad = jnp.zeros((n_blocks, HP, s_pad), jnp.float32).at[:, :H, :].set(dec_w * inv_t)
    db_pad = (dec_b * inv_t).astype(jnp.float32)

    return {'w': w_pad, 'b': b_pad, 'dec_w': dw_pad, 'dec_b': db_pad,
            'hid': H, 'hid_pad': HP, 'decoder_sizes': list(params['decoder_sizes'])}


if __name__ == "__main__":
    # Small deterministic shapes consistent with the module: controller_hid=32,
    # batch_size=2, skip_conn=False, 6 state-space components.
    key = jax.random.PRNGKey(0)
    B = 2
    H = 32
    state_space_length = [3, 4, 5, 4, 3, 6]
    TEMP, TANH_C = 5.0, 2.5

    k_params, k_x, k_seq = jax.random.split(key, 3)
    params = init_params(k_params, H, state_space_length)
    kparams = prepare_kernel_params(params, softmax_temperature=TEMP)

    hidden = (jnp.zeros((B, H), jnp.float32), jnp.zeros((B, H), jnp.float32))  # init_hidden
    x = jax.random.normal(k_x, (B, H), jnp.float32)

    # --- single forward() step; block_idx is runtime data -> one compiled kernel for all blocks
    for block_idx in (0, 3):
        logits, (h_new, c_new) = controller_forward(
            x, hidden, kparams, block_idx, tanh_c=TANH_C, mode='train')
        jax.block_until_ready((logits, h_new, c_new))
        r_logits, (r_h, r_c) = _ref_forward(
            x, hidden, params, block_idx,
            softmax_temperature=TEMP, tanh_c=TANH_C, mode='train')
        assert jnp.allclose(logits, r_logits, atol=1e-5, rtol=1e-5)
        assert jnp.allclose(h_new, r_h, atol=1e-5, rtol=1e-5)
        assert jnp.allclose(c_new, r_c, atol=1e-5, rtol=1e-5)

    # --- fused recurrence: T chained forward() steps, one pallas_call, one grid step
    T = len(state_space_length)
    x_seq = jax.random.normal(k_seq, (T, B, H), jnp.float32)
    block_indices = jnp.arange(T, dtype=jnp.int32)
    logits_pad, (hT, cT) = controller_forward_steps(
        x_seq, hidden, kparams, block_indices, tanh_c=TANH_C, mode='train')
    jax.block_until_ready((logits_pad, hT, cT))

    rh, rc = hidden
    for t in range(T):
        r_logits, (rh, rc) = _ref_forward(
            x_seq[t], (rh, rc), params, t,
            softmax_temperature=TEMP, tanh_c=TANH_C, mode='train')
        S = state_space_length[t]
        assert jnp.allclose(logits_pad[t, :, :S], r_logits, atol=1e-5, rtol=1e-5)
    assert jnp.allclose(hT, rh, atol=1e-5, rtol=1e-5)
    assert jnp.allclose(cT, rc, atol=1e-5, rtol=1e-5)

    # TODO(synk): component_sample / sample / action_sample / skip_sample perform
    # data-dependent multinomial sampling, embedding lookups/normalization and Python-side
    # list surgery between steps; only the forward hot path (LSTMCell + decoder +
    # temperature/tanh scaling) is a Pallas kernel.

    print("KERNEL_OK")
</pallas_src>

<mosaic_0001>
module attributes {stable_mosaic.version = 11 : i64} {
  func.func @_controller_rollout_kernel(%arg0: i32, %arg1: memref<1xi32, #tpu.memory_space<smem>>, %arg2: memref<1x8x128xf32, #tpu.memory_space<vmem>>, %arg3: memref<8x128xf32, #tpu.memory_space<vmem>>, %arg4: memref<8x128xf32, #tpu.memory_space<vmem>>, %arg5: memref<256x512xf32, #tpu.memory_space<vmem>>, %arg6: memref<1x512xf32, #tpu.memory_space<vmem>>, %arg7: memref<6x128x128xf32, #tpu.memory_space<vmem>>, %arg8: memref<6x1x128xf32, #tpu.memory_space<vmem>>, %arg9: memref<1x8x128xf32, #tpu.memory_space<vmem>>, %arg10: memref<8x128xf32, #tpu.memory_space<vmem>>, %arg11: memref<8x128xf32, #tpu.memory_space<vmem>>) attributes {dimension_semantics = [#tpu.dimension_semantics<arbitrary>], iteration_bounds = array<i64: 1>, scalar_prefetch = 1 : i64, scratch_operands = 0 : i64, tpu.core_type = #tpu.core_type<tc>, window_params = [{pipeline_mode = #tpu.pipeline_mode<synchronous>, transform_indices = @transform_0, window_bounds = array<i64: 1, 8, 128>}, {pipeline_mode = #tpu.pipeline_mode<synchronous>, transform_indices = @transform_1, window_bounds = array<i64: 8, 128>}, {pipeline_mode = #tpu.pipeline_mode<synchronous>, transform_indices = @transform_2, window_bounds = array<i64: 8, 128>}, {pipeline_mode = #tpu.pipeline_mode<synchronous>, transform_indices = @transform_3, window_bounds = array<i64: 256, 512>}, {pipeline_mode = #tpu.pipeline_mode<synchronous>, transform_indices = @transform_4, window_bounds = array<i64: 1, 512>}, {pipeline_mode = #tpu.pipeline_mode<synchronous>, transform_indices = @transform_5, window_bounds = array<i64: 6, 128, 128>}, {pipeline_mode = #tpu.pipeline_mode<synchronous>, transform_indices = @transform_6, window_bounds = array<i64: 6, 1, 128>}, {pipeline_mode = #tpu.pipeline_mode<synchronous>, transform_indices = @transform_7, window_bounds = array<i64: 1, 8, 128>}, {pipeline_mode = #tpu.pipeline_mode<synchronous>, transform_indices = @transform_8, window_bounds = array<i64: 8, 128>}, {pipeline_mode = #tpu.pipeline_mode<synchronous>, transform_indices = @transform_9, window_bounds = array<i64: 8, 128>}]} {
    %c0 = arith.constant 0 : index
    %c0_0 = arith.constant 0 : index
    %0 = vector.load %arg3[%c0, %c0_0] : memref<8x128xf32, #tpu.memory_space<vmem>>, vector<8x128xf32>
    %c0_1 = arith.constant 0 : index
    %c0_2 = arith.constant 0 : index
    %1 = vector.load %arg4[%c0_1, %c0_2] : memref<8x128xf32, #tpu.memory_space<vmem>>, vector<8x128xf32>
    %c0_i32 = arith.constant 0 : i32
    %2 = arith.index_cast %c0_i32 : i32 to index
    %c0_3 = arith.constant 0 : index
    %c0_4 = arith.constant 0 : index
    %3 = vector.load %arg2[%2, %c0_3, %c0_4] : memref<1x8x128xf32, #tpu.memory_space<vmem>>, vector<1x8x128xf32>
    %4 = vector.shape_cast %3 : vector<1x8x128xf32> to vector<8x128xf32>
    %5 = tpu.concatenate %4, %0 in 1 : vector<8x128xf32>, vector<8x128xf32> -> vector<8x256xf32>
    %c0_5 = arith.constant 0 : index
    %c0_6 = arith.constant 0 : index
    %6 = vector.load %arg5[%c0_5, %c0_6] : memref<256x512xf32, #tpu.memory_space<vmem>>, vector<256x512xf32>
    %cst = arith.constant dense<0.000000e+00> : vector<8x512xf32>
    %7 = tpu.matmul %5, %6, %cst {dimension_numbers = #tpu.dot_dimension_numbers<[1], [0], [0], [1], [0, 0, 1, 1], [], []>} : vector<8x256xf32>, vector<256x512xf32>, vector<8x512xf32> -> vector<8x512xf32>
    %c0_7 = arith.constant 0 : index
    %c0_8 = arith.constant 0 : index
    %8 = vector.load %arg6[%c0_7, %c0_8] : memref<1x512xf32, #tpu.memory_space<vmem>>, vector<1x512xf32>
    %9 = vector.broadcast %8 : vector<1x512xf32> to vector<8x512xf32>
    %10 = arith.addf %7, %9 : vector<8x512xf32>
    %11 = vector.extract_strided_slice %10 {offsets = [0, 0], sizes = [8, 128], strides = [1, 1]} : vector<8x512xf32> to vector<8x128xf32>
    %12 = arith.negf %11 : vector<8x128xf32>
    %13 = math.exp %12 : vector<8x128xf32>
    %cst_9 = arith.constant 1.000000e+00 : f32
    %14 = vector.broadcast %cst_9 : f32 to vector<8x128xf32>
    %15 = arith.addf %14, %13 : vector<8x128xf32>
    %16 = arith.divf %14, %15 : vector<8x128xf32>
    %17 = vector.extract_strided_slice %10 {offsets = [0, 128], sizes = [8, 128], strides = [1, 1]} : vector<8x512xf32> to vector<8x128xf32>
    %18 = arith.negf %17 : vector<8x128xf32>
    %19 = math.exp %18 : vector<8x128xf32>
    %cst_10 = arith.constant 1.000000e+00 : f32
    %20 = vector.broadcast %cst_10 : f32 to vector<8x128xf32>
    %21 = arith.addf %20, %19 : vector<8x128xf32>
    %22 = arith.divf %20, %21 : vector<8x128xf32>
    %23 = vector.extract_strided_slice %10 {offsets = [0, 256], sizes = [8, 128], strides = [1, 1]} : vector<8x512xf32> to vector<8x128xf32>
    %24 = math.tanh %23 : vector<8x128xf32>
    %25 = vector.extract_strided_slice %10 {offsets = [0, 384], sizes = [8, 128], strides = [1, 1]} : vector<8x512xf32> to vector<8x128xf32>
    %26 = arith.negf %25 : vector<8x128xf32>
    %27 = math.exp %26 : vector<8x128xf32>
    %cst_11 = arith.constant 1.000000e+00 : f32
    %28 = vector.broadcast %cst_11 : f32 to vector<8x128xf32>
    %29 = arith.addf %28, %27 : vector<8x128xf32>
    %30 = arith.divf %28, %29 : vector<8x128xf32>
    %31 = arith.mulf %22, %1 : vector<8x128xf32>
    %32 = arith.mulf %16, %24 : vector<8x128xf32>
    %33 = arith.addf %31, %32 : vector<8x128xf32>
    %34 = math.tanh %33 : vector<8x128xf32>
    %35 = arith.mulf %30, %34 : vector<8x128xf32>
    %36 = arith.index_cast %c0_i32 : i32 to index
    %37 = memref.load %arg1[%36] : memref<1xi32, #tpu.memory_space<smem>>
    %38 = arith.index_cast %37 : i32 to index
    %c0_12 = arith.constant 0 : index
    %c0_13 = arith.constant 0 : index
    %39 = vector.load %arg7[%38, %c0_12, %c0_13] : memref<6x128x128xf32, #tpu.memory_space<vmem>>, vector<1x128x128xf32>
    %40 = vector.shape_cast %39 : vector<1x128x128xf32> to vector<128x128xf32>
    %cst_14 = arith.constant dense<0.000000e+00> : vector<8x128xf32>
    %41 = tpu.matmul %35, %40, %cst_14 {dimension_numbers = #tpu.dot_dimension_numbers<[1], [0], [0], [1], [0, 0, 1, 1], [], []>} : vector<8x128xf32>, vector<128x128xf32>, vector<8x128xf32> -> vector<8x128xf32>
    %42 = arith.index_cast %37 : i32 to index
    %c0_15 = arith.constant 0 : index
    %c0_16 = arith.constant 0 : index
    %43 = vector.load %arg8[%42, %c0_15, %c0_16] : memref<6x1x128xf32, #tpu.memory_space<vmem>>, vector<1x1x128xf32>
    %44 = vector.shape_cast %43 : vector<1x1x128xf32> to vector<1x128xf32>
    %45 = vector.broadcast %44 : vector<1x128xf32> to vector<8x128xf32>
    %46 = arith.addf %41, %45 : vector<8x128xf32>
    %47 = math.tanh %46 : vector<8x128xf32>
    %cst_17 = arith.constant 2.500000e+00 : f32
    %48 = vector.broadcast %cst_17 : f32 to vector<8x128xf32>
    %49 = arith.mulf %48, %47 : vector<8x128xf32>
    %50 = arith.index_cast %c0_i32 : i32 to index
    %c0_18 = arith.constant 0 : index
    %c0_19 = arith.constant 0 : index
    %51 = vector.load %arg9[%50, %c0_18, %c0_19] : memref<1x8x128xf32, #tpu.memory_space<vmem>>, vector<1x8x128xf32>
    %52 = vector.shape_cast %51 : vector<1x8x128xf32> to vector<8x128xf32>
    %53 = vector.shape_cast %49 : vector<8x128xf32> to vector<1x8x128xf32>
    tpu.vector_store %arg9[%50, %c0_18, %c0_19], %53 {strides = array<i32>} : memref<1x8x128xf32, #tpu.memory_space<vmem>>, vector<1x8x128xf32>,
    %c1_i32 = arith.constant 1 : i32
    %c0_20 = arith.constant 0 : index
    %c0_21 = arith.constant 0 : index
    %54 = vector.load %arg10[%c0_20, %c0_21] : memref<8x128xf32, #tpu.memory_space<vmem>>, vector<8x128xf32>
    tpu.vector_store %arg10[%c0_20, %c0_21], %35 {strides = array<i32>} : memref<8x128xf32, #tpu.memory_space<vmem>>, vector<8x128xf32>,
    %c0_22 = arith.constant 0 : index
    %c0_23 = arith.constant 0 : index
    %55 = vector.load %arg11[%c0_22, %c0_23] : memref<8x128xf32, #tpu.memory_space<vmem>>, vector<8x128xf32>
    tpu.vector_store %arg11[%c0_22, %c0_23], %33 {strides = array<i32>} : memref<8x128xf32, #tpu.memory_space<vmem>>, vector<8x128xf32>,
    return
  }
  func.func @transform_0(%arg0: i32, %arg1: memref<1xi32, #tpu.memory_space<smem>>) -> (i32, i32, i32) {
    %c0_i32 = arith.constant 0 : i32
    %c0_i32_0 = arith.constant 0 : i32
    %c0_i32_1 = arith.constant 0 : i32
    %c0_i32_2 = arith.constant 0 : i32
    return %c0_i32, %c0_i32_0, %c0_i32_1 : i32, i32, i32
  }
  func.func @transform_1(%arg0: i32, %arg1: memref<1xi32, #tpu.memory_space<smem>>) -> (i32, i32) {
    %c0_i32 = arith.constant 0 : i32
    %c0_i32_0 = arith.constant 0 : i32
    %c0_i32_1 = arith.constant 0 : i32
    return %c0_i32, %c0_i32_0 : i32, i32
  }
  func.func @transform_2(%arg0: i32, %arg1: memref<1xi32, #tpu.memory_space<smem>>) -> (i32, i32) {
    %c0_i32 = arith.constant 0 : i32
    %c0_i32_0 = arith.constant 0 : i32
    %c0_i32_1 = arith.constant 0 : i32
    return %c0_i32, %c0_i32_0 : i32, i32
  }
  func.func @transform_3(%arg0: i32, %arg1: memref<1xi32, #tpu.memory_space<smem>>) -> (i32, i32) {
    %c0_i32 = arith.constant 0 : i32
    %c0_i32_0 = arith.constant 0 : i32
    %c0_i32_1 = arith.constant 0 : i32
    return %c0_i32, %c0_i32_0 : i32, i32
  }
  func.func @transform_4(%arg0: i32, %arg1: memref<1xi32, #tpu.memory_space<smem>>) -> (i32, i32) {
    %c0_i32 = arith.constant 0 : i32
    %c0_i32_0 = arith.constant 0 : i32
    %c0_i32_1 = arith.constant 0 : i32
    return %c0_i32, %c0_i32_0 : i32, i32
  }
  func.func @transform_5(%arg0: i32, %arg1: memref<1xi32, #tpu.memory_space<smem>>) -> (i32, i32, i32) {
    %c0_i32 = arith.constant 0 : i32
    %c0_i32_0 = arith.constant 0 : i32
    %c0_i32_1 = arith.constant 0 : i32
    %c0_i32_2 = arith.constant 0 : i32
    return %c0_i32, %c0_i32_0, %c0_i32_1 : i32, i32, i32
  }
  func.func @transform_6(%arg0: i32, %arg1: memref<1xi32, #tpu.memory_space<smem>>) -> (i32, i32, i32) {
    %c0_i32 = arith.constant 0 : i32
    %c0_i32_0 = arith.constant 0 : i32
    %c0_i32_1 = arith.constant 0 : i32
    %c0_i32_2 = arith.constant 0 : i32
    return %c0_i32, %c0_i32_0, %c0_i32_1 : i32, i32, i32
  }
  func.func @transform_7(%arg0: i32, %arg1: memref<1xi32, #tpu.memory_space<smem>>) -> (i32, i32, i32) {
    %c0_i32 = arith.constant 0 : i32
    %c0_i32_0 = arith.constant 0 : i32
    %c0_i32_1 = arith.constant 0 : i32
    %c0_i32_2 = arith.constant 0 : i32
    return %c0_i32, %c0_i32_0, %c0_i32_1 : i32, i32, i32
  }
  func.func @transform_8(%arg0: i32, %arg1: memref<1xi32, #tpu.memory_space<smem>>) -> (i32, i32) {
    %c0_i32 = arith.constant 0 : i32
    %c0_i32_0 = arith.constant 0 : i32
    %c0_i32_1 = arith.constant 0 : i32
    return %c0_i32, %c0_i32_0 : i32, i32
  }
  func.func @transform_9(%arg0: i32, %arg1: memref<1xi32, #tpu.memory_space<smem>>) -> (i32, i32) {
    %c0_i32 = arith.constant 0 : i32
    %c0_i32_0 = arith.constant 0 : i32
    %c0_i32_1 = arith.constant 0 : i32
    return %c0_i32, %c0_i32_0 : i32, i32
  }
}

</mosaic_0001>

<llo_original>
// kernel: tpu_custom_call.1
$region0: #{tpu_custom_call.1}
  #allocation0 [shape = 'u32[]', space=smem, size = 0x4, offset = 0x4, fixed_abs, tag = 'smem constant byte address 0x4 - core index']
  #allocation1 [shape = 'u32[144,128]{1,0:T(1,128)}', space=vmem, size = 0x12000, scoped, tag = 'internal scratch']
  #allocation2 [shape = 's32[1]{0}', space=sflag, size = 0x4, scoped, tag = 'scoped memory for tpu_custom_call.1']
  #allocation3 [shape = 's32[1]{0:T(128)S(6)}', space=smem, size = 0x200, scoped, tag = 'prefetched SMEM operand 0']
  %s0 = inlined_call_operand.<no memory space> [shape: s32[1], index: 0, kind: input, shape index: {}]
  %s1 = inlined_call_operand.hbm [shape: f32[1,8,128], index: 1, kind: input, shape index: {}]
  %s2 = inlined_call_operand.hbm [shape: f32[8,128], index: 2, kind: input, shape index: {}]
  %s3 = inlined_call_operand.vmem [shape: f32[8,128], index: 3, kind: input, shape index: {}]
  %s4 = inlined_call_operand.hbm [shape: f32[256,512], index: 4, kind: input, shape index: {}]
  %s5 = inlined_call_operand.vmem [shape: f32[1,512], index: 5, kind: input, shape index: {}]
  %s6 = inlined_call_operand.hbm [shape: f32[6,128,128], index: 6, kind: input, shape index: {}]
  %s7 = inlined_call_operand.vmem [shape: f32[6,1,128], index: 7, kind: input, shape index: {}]
  %s8 = inlined_call_operand.hbm [shape: f32[1,8,128], index: 8, kind: output, shape index: {0}]
  %s9 = inlined_call_operand.hbm [shape: f32[8,128], index: 9, kind: output, shape index: {1}]
  %s10 = inlined_call_operand.hbm [shape: f32[8,128], index: 10, kind: output, shape index: {2}]
  %11 = xla_tuple %s8, %s9, %s10
  %s12 = sld [smem:[#allocation0]]
  $region70: #{tpu_custom_call.1} parent=0
    _
  %s14 = ssub.s32 1, %s12
  %s15 = scalar_select 0, %s14, %s12
  %16 = sst [smem:[#allocation3]] %s0
  $region1: #{tpu_custom_call.1} parent=0
    #allocation4 [shape = 'u8[4096]{0}', space=vmem, size = 0x1000, scoped, tag = 'input window, operand 1, single buffered']
    #allocation5 [shape = 's32[1]{0}', space=sflag, size = 0x4, scoped, tag = 'scoped memory for tpu_custom_call.1']
    #allocation6 [shape = 's32[1]{0}', space=sflag, size = 0x4, scoped, tag = 'scoped memory for tpu_custom_call.1']
    #allocation7 [shape = 'u8[4096]{0}', space=vmem, size = 0x1000, scoped, tag = 'input window, operand 2, single buffered']
    #allocation8 [shape = 's32[1]{0}', space=sflag, size = 0x4, scoped, tag = 'scoped memory for tpu_custom_call.1']
    #allocation9 [shape = 'u8[524288]{0}', space=vmem, size = 0x80000, scoped, tag = 'input window, operand 4, single buffered']
    #allocation10 [shape = 'u8[393216]{0}', space=vmem, size = 0x60000, scoped, tag = 'input window, operand 6, single buffered']
    #allocation11 [shape = 's32[1]{0}', space=sflag, size = 0x4, scoped, tag = 'scoped memory for tpu_custom_call.1']
    #allocation12 [shape = 'u8[4096]{0}', space=vmem, size = 0x1000, scoped, tag = 'output window, operand 0, single buffered']
    #allocation13 [shape = 'u8[4096]{0}', space=vmem, size = 0x1000, scoped, tag = 'output window, operand 1, single buffered']
    #allocation14 [shape = 's32[1]{0}', space=sflag, size = 0x4, scoped, tag = 'scoped memory for tpu_custom_call.1']
    #allocation15 [shape = 'u8[4096]{0}', space=vmem, size = 0x1000, scoped, tag = 'output window, operand 2, single buffered']
    %17 = vsyncpa [#allocation5], 0
    %18 = vsyncpa [#allocation8], 0
    %19 = vsyncpa [#allocation11], 0
    %20 = vsyncpa [#allocation6], 0
    %21 = vsyncpa [#allocation14], 0
    // Predicated region
    $region2: #{tpu_custom_call.1} parent=1 // pred_check
      _
    $region3: #{tpu_custom_call.1} parent=1 // pred_check_branch
      %23 = sbr.rel (0) target = $region5
    $region4: #{tpu_custom_call.1} parent=1 // pred_region
      %s25 = ssub.s32 128, 128
      %26 = vsyncadd [#allocation5], %s25
      %s28 = sshll.u32 [#allocation4], 4
      %s29 = int_to_ptr.vmem [resolvable:$true] %s28
      %31 = dma.hbm_to_vmem [thread:$0]  %s1, 128, %s29, [#allocation5]
    $region5: #{tpu_custom_call.1} parent=1 // pred_fallthru
      _
    // Predicated region
    $region6: #{tpu_custom_call.1} parent=1 // pred_check
      _
    $region7: #{tpu_custom_call.1} parent=1 // pred_check_branch
      %33 = sbr.rel (0) target = $region9
    $region8: #{tpu_custom_call.1} parent=1 // pred_region
      %s35 = ssub.s32 128, 128
      %36 = vsyncadd [#allocation8], %s35
      %s38 = sshll.u32 [#allocation7], 4
      %s39 = int_to_ptr.vmem [resolvable:$true] %s38
      %41 = dma.hbm_to_vmem [thread:$0]  %s2, 128, %s39, [#allocation8]
    $region9: #{tpu_custom_call.1} parent=1 // pred_fallthru
      _
    // Predicated region
    $region10: #{tpu_custom_call.1} parent=1 // pred_check
      _
    $region11: #{tpu_custom_call.1} parent=1 // pred_check_branch
      %43 = sbr.rel (0) target = $region13
    $region12: #{tpu_custom_call.1} parent=1 // pred_region
      _
    $region13: #{tpu_custom_call.1} parent=1 // pred_fallthru
      _
    // Predicated region
    $region14: #{tpu_custom_call.1} parent=1 // pred_check
      _
    $region15: #{tpu_custom_call.1} parent=1 // pred_check_branch
      %45 = sbr.rel (0) target = $region17
    $region16: #{tpu_custom_call.1} parent=1 // pred_region
      %s47 = ssub.s32 16384, 16384
      %48 = vsyncadd [#allocation8], %s47
      %s49 = sshll.u32 [#allocation9], 4
      %s50 = int_to_ptr.vmem [resolvable:$true] %s49
      %55 = dma.hbm_to_vmem [thread:$0]  %s4, 16384, %s50, [#allocation8], 512, 512, 32
    $region17: #{tpu_custom_call.1} parent=1 // pred_fallthru
      _
    // Predicated region
    $region18: #{tpu_custom_call.1} parent=1 // pred_check
      _
    $region19: #{tpu_custom_call.1} parent=1 // pred_check_branch
      %57 = sbr.rel (0) target = $region21
    $region20: #{tpu_custom_call.1} parent=1 // pred_region
      _
    $region21: #{tpu_custom_call.1} parent=1 // pred_fallthru
      _
    // Predicated region
    $region22: #{tpu_custom_call.1} parent=1 // pred_check
      _
    $region23: #{tpu_custom_call.1} parent=1 // pred_check_branch
      %59 = sbr.rel (0) target = $region25
    $region24: #{tpu_custom_call.1} parent=1 // pred_region
      %s61 = ssub.s32 12288, 12288
      %62 = vsyncadd [#allocation11], %s61
      %s63 = sshll.u32 [#allocation10], 4
      %s64 = int_to_ptr.vmem [resolvable:$true] %s63
      %69 = dma.hbm_to_vmem [thread:$0]  %s6, 12288, %s64, [#allocation11], 128, 128, 8
    $region25: #{tpu_custom_call.1} parent=1 // pred_fallthru
      _
    // Predicated region
    $region26: #{tpu_custom_call.1} parent=1 // pred_check
      _
    $region27: #{tpu_custom_call.1} parent=1 // pred_check_branch
      %71 = sbr.rel (0) target = $region29
    $region28: #{tpu_custom_call.1} parent=1 // pred_region
      _
    $region29: #{tpu_custom_call.1} parent=1 // pred_fallthru
      _
    // Predicated region
    $region30: #{tpu_custom_call.1} parent=1 // pred_check
      _
    $region31: #{tpu_custom_call.1} parent=1 // pred_check_branch
      %73 = sbr.rel (0) target = $region33
    $region32: #{tpu_custom_call.1} parent=1 // pred_region
      %74 = dma.done [#allocation5], 128
    $region33: #{tpu_custom_call.1} parent=1 // pred_fallthru
      _
    // Predicated region
    $region34: #{tpu_custom_call.1} parent=1 // pred_check
      _
    $region35: #{tpu_custom_call.1} parent=1 // pred_check_branch
      %76 = sbr.rel (0) target = $region37
    $region36: #{tpu_custom_call.1} parent=1 // pred_region
      %77 = dma.done [#allocation8], 128
    $region37: #{tpu_custom_call.1} parent=1 // pred_fallthru
      _
    // Predicated region
    $region38: #{tpu_custom_call.1} parent=1 // pred_check
      _
    $region39: #{tpu_custom_call.1} parent=1 // pred_check_branch
      %79 = sbr.rel (0) target = $region41
    $region40: #{tpu_custom_call.1} parent=1 // pred_region
      %80 = dma.done [#allocation8], 16384
    $region41: #{tpu_custom_call.1} parent=1 // pred_fallthru
      _
    // Predicated region
    $region42: #{tpu_custom_call.1} parent=1 // pred_check
      _
    $region43: #{tpu_custom_call.1} parent=1 // pred_check_branch
      %82 = sbr.rel (0) target = $region45
    $region44: #{tpu_custom_call.1} parent=1 // pred_region
      %83 = dma.done [#allocation11], 12288
    $region45: #{tpu_custom_call.1} parent=1 // pred_fallthru
      _
    %v84 = vld [vmem:[#allocation7] sm:$0xff]
    %v85 = vld [vmem:[%s3] sm:$0xff]
    %v86 = vld [vmem:[#allocation4] sm:$0xff]
    %v87 = vld [vmem:[#allocation9] sm:$0xff]
    %v88 = vld [vmem:[#allocation9 + $0x8] sm:$0xff]
    %v89 = vld [vmem:[#allocation9 + $0x10] sm:$0xff]
    %v90 = vld [vmem:[#allocation9 + $0x18] sm:$0xff]
    %v91 = vld [vmem:[#allocation9 + $0x20] sm:$0xff]
    %v92 = vld [vmem:[#allocation9 + $0x28] sm:$0xff]
    %v93 = vld [vmem:[#allocation9 + $0x30] sm:$0xff]
    %v94 = vld [vmem:[#allocation9 + $0x38] sm:$0xff]
    %v95 = vld [vmem:[#allocation9 + $0x40] sm:$0xff]
    %v96 = vld [vmem:[#allocation9 + $0x48] sm:$0xff]
    %v97 = vld [vmem:[#allocation9 + $0x50] sm:$0xff]
    %v98 = vld [vmem:[#allocation9 + $0x58] sm:$0xff]
    %v99 = vld [vmem:[#allocation9 + $0x60] sm:$0xff]
    %v100 = vld [vmem:[#allocation9 + $0x68] sm:$0xff]
    %v101 = vld [vmem:[#allocation9 + $0x70] sm:$0xff]
    %v102 = vld [vmem:[#allocation9 + $0x78] sm:$0xff]
    %v103 = vld [vmem:[#allocation9 + $0x80] sm:$0xff]
    %v104 = vld [vmem:[#allocation9 + $0x88] sm:$0xff]
    %v105 = vld [vmem:[#allocation9 + $0x90] sm:$0xff]
    %v106 = vld [vmem:[#allocation9 + $0x98] sm:$0xff]
    %v107 = vld [vmem:[#allocation9 + $0xa0] sm:$0xff]
    %v108 = vld [vmem:[#allocation9 + $0xa8] sm:$0xff]
    %v109 = vld [vmem:[#allocation9 + $0xb0] sm:$0xff]
    %v110 = vld [vmem:[#allocation9 + $0xb8] sm:$0xff]
    %v111 = vld [vmem:[#allocation9 + $0xc0] sm:$0xff]
    %v112 = vld [vmem:[#allocation9 + $0xc8] sm:$0xff]
    %v113 = vld [vmem:[#allocation9 + $0xd0] sm:$0xff]
    %v114 = vld [vmem:[#allocation9 + $0xd8] sm:$0xff]
    %v115 = vld [vmem:[#allocation9 + $0xe0] sm:$0xff]
    %v116 = vld [vmem:[#allocation9 + $0xe8] sm:$0xff]
    %v117 = vld [vmem:[#allocation9 + $0xf0] sm:$0xff]
    %v118 = vld [vmem:[#allocation9 + $0xf8] sm:$0xff]
    %v119 = vld [vmem:[#allocation9 + $0x100] sm:$0xff]
    %v120 = vld [vmem:[#allocation9 + $0x108] sm:$0xff]
    %v121 = vld [vmem:[#allocation9 + $0x110] sm:$0xff]
    %v122 = vld [vmem:[#allocation9 + $0x118] sm:$0xff]
    %v123 = vld [vmem:[#allocation9 + $0x120] sm:$0xff]
    %v124 = vld [vmem:[#allocation9 + $0x128] sm:$0xff]
    %v125 = vld [vmem:[#allocation9 + $0x130] sm:$0xff]
    %v126 = vld [vmem:[#allocation9 + $0x138] sm:$0xff]
    %v127 = vld [vmem:[#allocation9 + $0x140] sm:$0xff]
    %v128 = vld [vmem:[#allocation9 + $0x148] sm:$0xff]
    %v129 = vld [vmem:[#allocation9 + $0x150] sm:$0xff]
    %v130 = vld [vmem:[#allocation9 + $0x158] sm:$0xff]
    %v131 = vld [vmem:[#allocation9 + $0x160] sm:$0xff]
    %v132 = vld [vmem:[#allocation9 + $0x168] sm:$0xff]
    %v133 = vld [vmem:[#allocation9 + $0x170] sm:$0xff]
    %v134 = vld [vmem:[#allocation9 + $0x178] sm:$0xff]
    %v135 = vld [vmem:[#allocation9 + $0x180] sm:$0xff]
    %v136 = vld [vmem:[#allocation9 + $0x188] sm:$0xff]
    %v137 = vld [vmem:[#allocation9 + $0x190] sm:$0xff]
    %v138 = vld [vmem:[#allocation9 + $0x198] sm:$0xff]
    %v139 = vld [vmem:[#allocation9 + $0x1a0] sm:$0xff]
    %v140 = vld [vmem:[#allocation9 + $0x1a8] sm:$0xff]
    %v141 = vld [vmem:[#allocation9 + $0x1b0] sm:$0xff]
    %v142 = vld [vmem:[#allocation9 + $0x1b8] sm:$0xff]
    %v143 = vld [vmem:[#allocation9 + $0x1c0] sm:$0xff]
    %v144 = vld [vmem:[#allocation9 + $0x1c8] sm:$0xff]
    %v145 = vld [vmem:[#allocation9 + $0x1d0] sm:$0xff]
    %v146 = vld [vmem:[#allocation9 + $0x1d8] sm:$0xff]
    %v147 = vld [vmem:[#allocation9 + $0x1e0] sm:$0xff]
    %v148 = vld [vmem:[#allocation9 + $0x1e8] sm:$0xff]
    %v149 = vld [vmem:[#allocation9 + $0x1f0] sm:$0xff]
    %v150 = vld [vmem:[#allocation9 + $0x1f8] sm:$0xff]
    %v151 = vld [vmem:[#allocation9 + $0x200] sm:$0xff]
    %v152 = vld [vmem:[#allocation9 + $0x208] sm:$0xff]
    %v153 = vld [vmem:[#allocation9 + $0x210] sm:$0xff]
    %v154 = vld [vmem:[#allocation9 + $0x218] sm:$0xff]
    %v155 = vld [vmem:[#allocation9 + $0x220] sm:$0xff]
    %v156 = vld [vmem:[#allocation9 + $0x228] sm:$0xff]
    %v157 = vld [vmem:[#allocation9 + $0x230] sm:$0xff]
    %v158 = vld [vmem:[#allocation9 + $0x238] sm:$0xff]
    %v159 = vld [vmem:[#allocation9 + $0x240] sm:$0xff]
    %v160 = vld [vmem:[#allocation9 + $0x248] sm:$0xff]
    %v161 = vld [vmem:[#allocation9 + $0x250] sm:$0xff]
    %v162 = vld [vmem:[#allocation9 + $0x258] sm:$0xff]
    %v163 = vld [vmem:[#allocation9 + $0x260] sm:$0xff]
    %v164 = vld [vmem:[#allocation9 + $0x268] sm:$0xff]
    %v165 = vld [vmem:[#allocation9 + $0x270] sm:$0xff]
    %v166 = vld [vmem:[#allocation9 + $0x278] sm:$0xff]
    %v167 = vld [vmem:[#allocation9 + $0x280] sm:$0xff]
    %v168 = vld [vmem:[#allocation9 + $0x288] sm:$0xff]
    %v169 = vld [vmem:[#allocation9 + $0x290] sm:$0xff]
    %v170 = vld [vmem:[#allocation9 + $0x298] sm:$0xff]
    %v171 = vld [vmem:[#allocation9 + $0x2a0] sm:$0xff]
    %v172 = vld [vmem:[#allocation9 + $0x2a8] sm:$0xff]
    %v173 = vld [vmem:[#allocation9 + $0x2b0] sm:$0xff]
    %v174 = vld [vmem:[#allocation9 + $0x2b8] sm:$0xff]
    %v175 = vld [vmem:[#allocation9 + $0x2c0] sm:$0xff]
    %v176 = vld [vmem:[#allocation9 + $0x2c8] sm:$0xff]
    %v177 = vld [vmem:[#allocation9 + $0x2d0] sm:$0xff]
    %v178 = vld [vmem:[#allocation9 + $0x2d8] sm:$0xff]
    %v179 = vld [vmem:[#allocation9 + $0x2e0] sm:$0xff]
    %v180 = vld [vmem:[#allocation9 + $0x2e8] sm:$0xff]
    %v181 = vld [vmem:[#allocation9 + $0x2f0] sm:$0xff]
    %v182 = vld [vmem:[#allocation9 + $0x2f8] sm:$0xff]
    %v183 = vld [vmem:[#allocation9 + $0x300] sm:$0xff]
    %v184 = vld [vmem:[#allocation9 + $0x308] sm:$0xff]
    %v185 = vld [vmem:[#allocation9 + $0x310] sm:$0xff]
    %v186 = vld [vmem:[#allocation9 + $0x318] sm:$0xff]
    %v187 = vld [vmem:[#allocation9 + $0x320] sm:$0xff]
    %v188 = vld [vmem:[#allocation9 + $0x328] sm:$0xff]
    %v189 = vld [vmem:[#allocation9 + $0x330] sm:$0xff]
    %v190 = vld [vmem:[#allocation9 + $0x338] sm:$0xff]
    %v191 = vld [vmem:[#allocation9 + $0x340] sm:$0xff]
    %v192 = vld [vmem:[#allocation9 + $0x348] sm:$0xff]
    %v193 = vld [vmem:[#allocation9 + $0x350] sm:$0xff]
    %v194 = vld [vmem:[#allocation9 + $0x358] sm:$0xff]
    %v195 = vld [vmem:[#allocation9 + $0x360] sm:$0xff]
    %v196 = vld [vmem:[#allocation9 + $0x368] sm:$0xff]
    %v197 = vld [vmem:[#allocation9 + $0x370] sm:$0xff]
    %v198 = vld [vmem:[#allocation9 + $0x378] sm:$0xff]
    %v199 = vld [vmem:[#allocation9 + $0x380] sm:$0xff]
    %v200 = vld [vmem:[#allocation9 + $0x388] sm:$0xff]
    %v201 = vld [vmem:[#allocation9 + $0x390] sm:$0xff]
    %v202 = vld [vmem:[#allocation9 + $0x398] sm:$0xff]
    %v203 = vld [vmem:[#allocation9 + $0x3a0] sm:$0xff]
    %v204 = vld [vmem:[#allocation9 + $0x3a8] sm:$0xff]
    %v205 = vld [vmem:[#allocation9 + $0x3b0] sm:$0xff]
    %v206 = vld [vmem:[#allocation9 + $0x3b8] sm:$0xff]
    %v207 = vld [vmem:[#allocation9 + $0x3c0] sm:$0xff]
    %v208 = vld [vmem:[#allocation9 + $0x3c8] sm:$0xff]
    %v209 = vld [vmem:[#allocation9 + $0x3d0] sm:$0xff]
    %v210 = vld [vmem:[#allocation9 + $0x3d8] sm:$0xff]
    %v211 = vld [vmem:[#allocation9 + $0x3e0] sm:$0xff]
    %v212 = vld [vmem:[#allocation9 + $0x3e8] sm:$0xff]
    %v213 = vld [vmem:[#allocation9 + $0x3f0] sm:$0xff]
    %v214 = vld [vmem:[#allocation9 + $0x3f8] sm:$0xff]
    %v215 = vld [vmem:[%s5] sm:$0xf]
    %v217 = vlaneseq
    %v218 = vshrl.u32 %v217, 7
    %v219 = vsub.s32 0, %v218
    %v220 = vrot.slane %v215, %v219
    %v221 = vlaneseq
    %v222 = vshrl.u32 %v221, 7
    %v223 = vsub.s32 1, %v222
    %v224 = vrot.slane %v215, %v223
    %v225 = vlaneseq
    %v226 = vshrl.u32 %v225, 7
    %v227 = vsub.s32 2, %v226
    %v228 = vrot.slane %v215, %v227
    %v229 = vlaneseq
    %v230 = vshrl.u32 %v229, 7
    %v231 = vsub.s32 3, %v230
    %v232 = vrot.slane %v215, %v231
    %237 = vmatprep.subr.mxu0 %v88
    %238 = vmatpush1.msra.mxu0 %v87
    %239 = vmatprep.subr.mxu0 %v92
    %240 = vmatpush1.msra.mxu0 %v91
    %241 = vmatprep.subr.mxu0 %v96
    %242 = vmatpush1.msra.mxu0 %v95
    %243 = vmatprep.subr.mxu0 %v100
    %244 = vmatpush1.msra.mxu0 %v99
    %245 = vmatprep.subr.mxu0 %v104
    %246 = vmatpush1.msra.mxu0 %v103
    %247 = vmatprep.subr.mxu0 %v108
    %248 = vmatpush1.msra.mxu0 %v107
    %249 = vmatprep.subr.mxu0 %v112
    %250 = vmatpush1.msra.mxu0 %v111
    %251 = vmatprep.subr.mxu0 %v116
    %252 = vmatpush1.msra.mxu0 %v115
    %253 = vmatprep.subr.mxu0 %v120
    %254 = vmatpush1.msra.mxu0 %v119
    %255 = vmatprep.subr.mxu0 %v124
    %256 = vmatpush1.msra.mxu0 %v123
    %257 = vmatprep.subr.mxu0 %v128
    %258 = vmatpush1.msra.mxu0 %v127
    %259 = vmatprep.subr.mxu0 %v132
    %260 = vmatpush1.msra.mxu0 %v131
    %261 = vmatprep.subr.mxu0 %v136
    %262 = vmatpush1.msra.mxu0 %v135
    %263 = vmatprep.subr.mxu0 %v140
    %264 = vmatpush1.msra.mxu0 %v139
    %265 = vmatprep.subr.mxu0 %v144
    %266 = vmatpush1.msra.mxu0 %v143
    %267 = vmatprep.subr.mxu0 %v148
    %268 = vmatpush1.msra.mxu0 %v147
    %269 = vmatprep.subr.mxu0 %v152
    %270 = vmatpush1.msra.mxu0 %v151
    %271 = vmatprep.subr.mxu0 %v156
    %272 = vmatpush1.msra.mxu0 %v155
    %273 = vmatprep.subr.mxu0 %v160
    %274 = vmatpush1.msra.mxu0 %v159
    %275 = vmatprep.subr.mxu0 %v164
    %276 = vmatpush1.msra.mxu0 %v163
    %277 = vmatprep.subr.mxu0 %v168
    %278 = vmatpush1.msra.mxu0 %v167
    %279 = vmatprep.subr.mxu0 %v172
    %280 = vmatpush1.msra.mxu0 %v171
    %281 = vmatprep.subr.mxu0 %v176
    %282 = vmatpush1.msra.mxu0 %v175
    %283 = vmatprep.subr.mxu0 %v180
    %284 = vmatpush1.msra.mxu0 %v179
    %285 = vmatprep.subr.mxu0 %v184
    %286 = vmatpush1.msra.mxu0 %v183
    %287 = vmatprep.subr.mxu0 %v188
    %288 = vmatpush1.msra.mxu0 %v187
    %289 = vmatprep.subr.mxu0 %v192
    %290 = vmatpush1.msra.mxu0 %v191
    %291 = vmatprep.subr.mxu0 %v196
    %292 = vmatpush1.msra.mxu0 %v195
    %293 = vmatprep.subr.mxu0 %v200
    %294 = vmatpush1.msra.mxu0 %v199
    %295 = vmatprep.subr.mxu0 %v204
    %296 = vmatpush1.msra.mxu0 %v203
    %297 = vmatprep.subr.mxu0 %v208
    %298 = vmatpush1.msra.mxu0 %v207
    %299 = vmatprep.subr.mxu0 %v212
    %300 = vmatpush1.msra.mxu0 %v211
    %301 = vmatprep.mubr.f32.mxu0 %v84
    %302 = vmatmul.mubr.f32.gmra.mrb[0].mxu0 %v86
    %v303 = vpop.f32.mrb[0].mxu0
    %v304 = vadd.f32 %v220, %v303
    %v305 = vpop.f32.mrb[0].mxu0
    %v306 = vadd.f32 %v224, %v305
    %307 = vdwg.mxu0
    %308 = vmatprep.subr.mxu0 %v90
    %309 = vmatpush1.msra.mxu0 %v89
    %310 = vmatprep.subr.mxu0 %v94
    %311 = vmatpush1.msra.mxu0 %v93
    %312 = vmatprep.subr.mxu0 %v98
    %313 = vmatpush1.msra.mxu0 %v97
    %314 = vmatprep.subr.mxu0 %v102
    %315 = vmatpush1.msra.mxu0 %v101
    %316 = vmatprep.subr.mxu0 %v106
    %317 = vmatpush1.msra.mxu0 %v105
    %318 = vmatprep.subr.mxu0 %v110
    %319 = vmatpush1.msra.mxu0 %v109
    %320 = vmatprep.subr.mxu0 %v114
    %321 = vmatpush1.msra.mxu0 %v113
    %322 = vmatprep.subr.mxu0 %v118
    %323 = vmatpush1.msra.mxu0 %v117
    %324 = vmatprep.subr.mxu0 %v122
    %325 = vmatpush1.msra.mxu0 %v121
    %326 = vmatprep.subr.mxu0 %v126
    %327 = vmatpush1.msra.mxu0 %v125
    %328 = vmatprep.subr.mxu0 %v130
    %329 = vmatpush1.msra.mxu0 %v129
    %330 = vmatprep.subr.mxu0 %v134
    %331 = vmatpush1.msra.mxu0 %v133
    %332 = vmatprep.subr.mxu0 %v138
    %333 = vmatpush1.msra.mxu0 %v137
    %334 = vmatprep.subr.mxu0 %v142
    %335 = vmatpush1.msra.mxu0 %v141
    %336 = vmatprep.subr.mxu0 %v146
    %337 = vmatpush1.msra.mxu0 %v145
    %338 = vmatprep.subr.mxu0 %v150
    %339 = vmatpush1.msra.mxu0 %v149
    %340 = vmatprep.subr.mxu0 %v154
    %341 = vmatpush1.msra.mxu0 %v153
    %342 = vmatprep.subr.mxu0 %v158
    %343 = vmatpush1.msra.mxu0 %v157
    %344 = vmatprep.subr.mxu0 %v162
    %345 = vmatpush1.msra.mxu0 %v161
    %346 = vmatprep.subr.mxu0 %v166
    %347 = vmatpush1.msra.mxu0 %v165
    %348 = vmatprep.subr.mxu0 %v170
    %349 = vmatpush1.msra.mxu0 %v169
    %350 = vmatprep.subr.mxu0 %v174
    %351 = vmatpush1.msra.mxu0 %v173
    %352 = vmatprep.subr.mxu0 %v178
    %353 = vmatpush1.msra.mxu0 %v177
    %354 = vmatprep.subr.mxu0 %v182
    %355 = vmatpush1.msra.mxu0 %v181
    %356 = vmatprep.subr.mxu0 %v186
    %357 = vmatpush1.msra.mxu0 %v185
    %358 = vmatprep.subr.mxu0 %v190
    %359 = vmatpush1.msra.mxu0 %v189
    %360 = vmatprep.subr.mxu0 %v194
    %361 = vmatpush1.msra.mxu0 %v193
    %362 = vmatprep.subr.mxu0 %v198
    %363 = vmatpush1.msra.mxu0 %v197
    %364 = vmatprep.subr.mxu0 %v202
    %365 = vmatpush1.msra.mxu0 %v201
    %366 = vmatprep.subr.mxu0 %v206
    %367 = vmatpush1.msra.mxu0 %v205
    %368 = vmatprep.subr.mxu0 %v210
    %369 = vmatpush1.msra.mxu0 %v209
    %370 = vmatprep.subr.mxu0 %v214
    %371 = vmatpush1.msra.mxu0 %v213
    %372 = vmatprep.mubr.f32.mxu0 %v84
    %373 = vmatmul.mubr.f32.gmra.mrb[0].mxu0 %v86
    %v374 = vpop.f32.mrb[0].mxu0
    %v375 = vadd.f32 %v228, %v374
    %v376 = vpop.f32.mrb[0].mxu0
    %v377 = vadd.f32 %v232, %v376
    %378 = vdwg.mxu0
    %v379 = vxor.u32 %v304, 2147483648
    %v380 = vmul.f32 %v379, 1.442695
    %v381 = vpow.pop %v380
    %v382 = vadd.f32 %v381, 1.0
    %v383 = vrcp.pop %v382
    %v384 = vmul.f32 1.0, %v383
    %v385 = vxor.u32 %v306, 2147483648
    %v386 = vmul.f32 %v385, 1.442695
    %v387 = vpow.pop %v386
    %v388 = vadd.f32 %v387, 1.0
    %v389 = vrcp.pop %v388
    %v390 = vmul.f32 1.0, %v389
    %v391 = vtanh.pop %v375
    %v392 = vxor.u32 %v377, 2147483648
    %v393 = vmul.f32 %v392, 1.442695
    %v394 = vpow.pop %v393
    %v395 = vadd.f32 %v394, 1.0
    %v396 = vrcp.pop %v395
    %v397 = vmul.f32 1.0, %v396
    %v398 = vmul.f32 %v390, %v85
    %v399 = vmul.f32 %v384, %v391
    %v400 = vadd.f32 %v398, %v399
    %v401 = vtanh.pop %v400
    %v402 = vmul.f32 %v397, %v401
    %s403 = sld [smem:[#allocation3]]
    %s404 = smul.u32 %s403, 128
    %s405 = scalar_lea.vmem [#allocation10], %s404
    %v406 = vld [vmem:[%s405] sm:$0xff]
    %v407 = vld [vmem:[%s405 + $0x8] sm:$0xff]
    %v408 = vld [vmem:[%s405 + $0x10] sm:$0xff]
    %v409 = vld [vmem:[%s405 + $0x18] sm:$0xff]
    %v410 = vld [vmem:[%s405 + $0x20] sm:$0xff]
    %v411 = vld [vmem:[%s405 + $0x28] sm:$0xff]
    %v412 = vld [vmem:[%s405 + $0x30] sm:$0xff]
    %v413 = vld [vmem:[%s405 + $0x38] sm:$0xff]
    %v414 = vld [vmem:[%s405 + $0x40] sm:$0xff]
    %v415 = vld [vmem:[%s405 + $0x48] sm:$0xff]
    %v416 = vld [vmem:[%s405 + $0x50] sm:$0xff]
    %v417 = vld [vmem:[%s405 + $0x58] sm:$0xff]
    %v418 = vld [vmem:[%s405 + $0x60] sm:$0xff]
    %v419 = vld [vmem:[%s405 + $0x68] sm:$0xff]
    %v420 = vld [vmem:[%s405 + $0x70] sm:$0xff]
    %v421 = vld [vmem:[%s405 + $0x78] sm:$0xff]
    %s422 = scalar_lea.vmem %s7, %s403
    %v423 = vld [vmem:[%s422] sm:$0x1]
    %v425 = vlaneseq
    %v426 = vshrl.u32 %v425, 7
    %v427 = vsub.s32 0, %v426
    %v428 = vrot.slane %v423, %v427
    %430 = vmatprep.subr.mxu0 0.0
    %431 = vmatpush1.msra.mxu0 %v406
    %432 = vmatprep.subr.mxu0 0.0
    %433 = vmatpush1.msra.mxu0 %v407
    %434 = vmatprep.subr.mxu0 0.0
    %435 = vmatpush1.msra.mxu0 %v408
    %436 = vmatprep.subr.mxu0 0.0
    %437 = vmatpush1.msra.mxu0 %v409
    %438 = vmatprep.subr.mxu0 0.0
    %439 = vmatpush1.msra.mxu0 %v410
    %440 = vmatprep.subr.mxu0 0.0
    %441 = vmatpush1.msra.mxu0 %v411
    %442 = vmatprep.subr.mxu0 0.0
    %443 = vmatpush1.msra.mxu0 %v412
    %444 = vmatprep.subr.mxu0 0.0
    %445 = vmatpush1.msra.mxu0 %v413
    %446 = vmatprep.subr.mxu0 0.0
    %447 = vmatpush1.msra.mxu0 %v414
    %448 = vmatprep.subr.mxu0 0.0
    %449 = vmatpush1.msra.mxu0 %v415
    %450 = vmatprep.subr.mxu0 0.0
    %451 = vmatpush1.msra.mxu0 %v416
    %452 = vmatprep.subr.mxu0 0.0
    %453 = vmatpush1.msra.mxu0 %v417
    %454 = vmatprep.subr.mxu0 0.0
    %455 = vmatpush1.msra.mxu0 %v418
    %456 = vmatprep.subr.mxu0 0.0
    %457 = vmatpush1.msra.mxu0 %v419
    %458 = vmatprep.subr.mxu0 0.0
    %459 = vmatpush1.msra.mxu0 %v420
    %460 = vmatprep.subr.mxu0 0.0
    %461 = vmatpush1.msra.mxu0 %v421
    %462 = vmatprep.subr.mxu0 0.0
    %463 = vmatpush1.msra.mxu0 0.0
    %464 = vmatprep.subr.mxu0 0.0
    %465 = vmatpush1.msra.mxu0 0.0
    %466 = vmatprep.subr.mxu0 0.0
    %467 = vmatpush1.msra.mxu0 0.0
    %468 = vmatprep.subr.mxu0 0.0
    %469 = vmatpush1.msra.mxu0 0.0
    %470 = vmatprep.subr.mxu0 0.0
    %471 = vmatpush1.msra.mxu0 0.0
    %472 = vmatprep.subr.mxu0 0.0
    %473 = vmatpush1.msra.mxu0 0.0
    %474 = vmatprep.subr.mxu0 0.0
    %475 = vmatpush1.msra.mxu0 0.0
    %476 = vmatprep.subr.mxu0 0.0
    %477 = vmatpush1.msra.mxu0 0.0
    %478 = vmatprep.subr.mxu0 0.0
    %479 = vmatpush1.msra.mxu0 0.0
    %480 = vmatprep.subr.mxu0 0.0
    %481 = vmatpush1.msra.mxu0 0.0
    %482 = vmatprep.subr.mxu0 0.0
    %483 = vmatpush1.msra.mxu0 0.0
    %484 = vmatprep.subr.mxu0 0.0
    %485 = vmatpush1.msra.mxu0 0.0
    %486 = vmatprep.subr.mxu0 0.0
    %487 = vmatpush1.msra.mxu0 0.0
    %488 = vmatprep.subr.mxu0 0.0
    %489 = vmatpush1.msra.mxu0 0.0
    %490 = vmatprep.subr.mxu0 0.0
    %491 = vmatpush1.msra.mxu0 0.0
    %492 = vmatprep.subr.mxu0 0.0
    %493 = vmatpush1.msra.mxu0 0.0
    %494 = vmatprep.mubr.f32.mxu0 0.0
    %495 = vmatmul.mubr.f32.gmra.mrb[0].mxu0 %v402
    %v496 = vpop.f32.mrb[0].mxu0
    %v497 = vadd.f32 %v428, %v496
    %v498 = vpop.f32.mrb[0].mxu0
    %499 = vdwg.mxu0
    %v500 = vtanh.pop %v497
    %v501 = vmul.f32 %v500, 2.5
    %502 = vst [vmem:[#allocation12] sm:$0xff] %v501
    %503 = vst [vmem:[#allocation13] sm:$0xff] %v402
    %504 = vst [vmem:[#allocation15] sm:$0xff] %v400
    // Predicated region
    $region46: #{tpu_custom_call.1} parent=1 // pred_check
      _
    $region47: #{tpu_custom_call.1} parent=1 // pred_check_branch
      %506 = sbr.rel (0) target = $region49
    $region48: #{tpu_custom_call.1} parent=1 // pred_region
      %s508 = ssub.s32 128, 128
      %509 = vsyncadd [#allocation6], %s508
      %s511 = sshll.u32 [#allocation12], 4
      %s512 = int_to_ptr.vmem [resolvable:$true] %s511
      %514 = dma.vmem_to_hbm [thread:$0]  %s512, 128, %s8, [#allocation6]
    $region49: #{tpu_custom_call.1} parent=1 // pred_fallthru
      _
    // Predicated region
    $region50: #{tpu_custom_call.1} parent=1 // pred_check
      _
    $region51: #{tpu_custom_call.1} parent=1 // pred_check_branch
      %516 = sbr.rel (0) target = $region53
    $region52: #{tpu_custom_call.1} parent=1 // pred_region
      %s518 = ssub.s32 128, 128
      %519 = vsyncadd [#allocation14], %s518
      %s521 = sshll.u32 [#allocation13], 4
      %s522 = int_to_ptr.vmem [resolvable:$true] %s521
      %524 = dma.vmem_to_hbm [thread:$0]  %s522, 128, %s9, [#allocation14]
    $region53: #{tpu_custom_call.1} parent=1 // pred_fallthru
      _
    // Predicated region
    $region54: #{tpu_custom_call.1} parent=1 // pred_check
      _
    $region55: #{tpu_custom_call.1} parent=1 // pred_check_branch
      %526 = sbr.rel (0) target = $region57
    $region56: #{tpu_custom_call.1} parent=1 // pred_region
      %s528 = ssub.s32 128, 128
      %529 = vsyncadd [#allocation14], %s528
      %s531 = sshll.u32 [#allocation15], 4
      %s532 = int_to_ptr.vmem [resolvable:$true] %s531
      %534 = dma.vmem_to_hbm [thread:$0]  %s532, 128, %s10, [#allocation14]
    $region57: #{tpu_custom_call.1} parent=1 // pred_fallthru
      _
    // Predicated region
    $region58: #{tpu_custom_call.1} parent=1 // pred_check
      _
    $region59: #{tpu_custom_call.1} parent=1 // pred_check_branch
      %536 = sbr.rel (0) target = $region61
    $region60: #{tpu_custom_call.1} parent=1 // pred_region
      %537 = dma.done [#allocation6], 128
    $region61: #{tpu_custom_call.1} parent=1 // pred_fallthru
      _
    // Predicated region
    $region62: #{tpu_custom_call.1} parent=1 // pred_check
      _
    $region63: #{tpu_custom_call.1} parent=1 // pred_check_branch
      %539 = sbr.rel (0) target = $region65
    $region64: #{tpu_custom_call.1} parent=1 // pred_region
      %540 = dma.done [#allocation14], 128
    $region65: #{tpu_custom_call.1} parent=1 // pred_fallthru
      _
    // Predicated region
    $region66: #{tpu_custom_call.1} parent=1 // pred_check
      _
    $region67: #{tpu_custom_call.1} parent=1 // pred_check_branch
      %542 = sbr.rel (0) target = $region69
    $region68: #{tpu_custom_call.1} parent=1 // pred_region
      %543 = dma.done [#allocation14], 128
    $region69: #{tpu_custom_call.1} parent=1 // pred_fallthru
      _
    %544 = vsyncpa [#allocation5], 1
    %545 = vsyncpa [#allocation8], 1
    %546 = vsyncpa [#allocation11], 1
    %547 = vsyncpa [#allocation6], 1
    %548 = vsyncpa [#allocation14], 1

</llo_original>
